<compile_context>
chip_gen: v7x
topology: tpu7x:2x2x1
jax: 0.10.0
libtpu: 0.0.40
codegen_flags: <defaults>
</compile_context>

<pallas_src>
import functools

import jax
import jax.numpy as jnp
from jax.experimental import pallas as pl
from jax.experimental.pallas import tpu as pltpu


# Explicit VMEM cap: above the 16/32 MiB scoped defaults, safely under v7x's
# 64 MiB physical VMEM (v5e/v6e have 128 MiB physical).
_VMEM_LIMIT_BYTES = 48 * 1024 * 1024
# Budget used when picking the row tile (covers the double-buffered streamed
# operand; the resident T / output buffers are small at realistic F).
_TILE_BUDGET_BYTES = 24 * 1024 * 1024


def _round_up(x: int, m: int) -> int:
    return (x + m - 1) // m * m


def _pick_row_tile(n_pad: int, streamed_bytes_per_row: int) -> int:
    """Largest row tile in {1024,512,256,128} dividing n_pad whose
    double-buffered streamed block fits the tile budget."""
    for tm in (1024, 512, 256, 128):
        if n_pad % tm == 0 and 2 * tm * streamed_bytes_per_row <= _TILE_BUDGET_BYTES:
            return tm
    # TODO(synk): for extreme N (or huge feature dims) add a second (K/column)
    # grid axis instead of falling back to the minimum row tile.
    return 128


# ---------------------------------------------------------------------------
# Kernels
# ---------------------------------------------------------------------------
def gcn_xw_kernel(d_ref, x_ref, w_ref, t_ref):
    """Pass (a): T[rows] = d[rows] * (X[rows] @ W)."""
    xw = jnp.dot(x_ref[...], w_ref[...], preferred_element_type=jnp.float32)
    t_ref[...] = d_ref[...] * xw


def gcn_agg_kernel(tm, d_ref, a_ref, t_ref, o_ref):
    """Pass (b): H[rows] = relu(d[rows] * (A[rows] @ T + T[rows])).

    The "+ T[rows]" term is the fused identity of A_hat = A + I, so A_hat is
    never materialized.  A arrives in bf16 (exact for 0/1 entries) and is
    upcast to f32 so accumulation / numerics stay f32-exact.
    """
    a = a_ref[...].astype(jnp.float32)                        # exact upcast
    agg = jnp.dot(a, t_ref[...], preferred_element_type=jnp.float32)   # MXU

    row0 = pl.multiple_of(pl.program_id(0) * tm, 128)
    t_rows = t_ref[pl.ds(row0, tm), :]                        # I @ T, this block

    out = d_ref[...] * (agg + t_rows)                         # VPU row scale
    o_ref[...] = jnp.maximum(out, 0.0).astype(o_ref.dtype)    # relu


# ---------------------------------------------------------------------------
# Wrapper (prepare == module __init__, forward == module forward)
# ---------------------------------------------------------------------------
def gcn_prepare(A, W):
    """Static per-layer precompute (mirrors GCNLayer.__init__)."""
    N = A.shape[0]
    in_dim, out_dim = W.shape

    A = A.astype(jnp.float32)
    # deg computed from A (not A_hat), exactly as in the PyTorch module; an
    # isolated node gives inf here and NaN/Inf rows downstream, same as torch.
    deg = jnp.sum(A, axis=1)
    d_neg_sqrt = jnp.power(deg, -0.5)

    N_pad = _round_up(N, 128)
    K_pad = _round_up(in_dim, 128)
    # TODO(synk): pad F to 256 if the layer ever becomes MXU-bound on v6e/v7x.
    F_pad = _round_up(out_dim, 128)

    # A stored bf16: 0/1 entries are exact and this halves the dominant N^2
    # HBM read.  A + I is fused inside the aggregation kernel.
    A_p = jnp.pad(A, ((0, N_pad - N), (0, N_pad - N))).astype(jnp.bfloat16)
    W_p = jnp.pad(W.astype(jnp.float32),
                  ((0, K_pad - in_dim), (0, F_pad - out_dim)))
    d_p = jnp.pad(d_neg_sqrt, (0, N_pad - N)).reshape(N_pad, 1)

    return dict(A=A_p, W=W_p, d=d_p, N=N, in_dim=in_dim, out_dim=out_dim,
                N_pad=N_pad, K_pad=K_pad, F_pad=F_pad)


def gcn_forward(params, X):
    """Per-call forward: H = relu(D^-1/2 A_hat D^-1/2 (X @ W))."""
    N, in_dim, out_dim = params["N"], params["in_dim"], params["out_dim"]
    N_pad, K_pad, F_pad = params["N_pad"], params["K_pad"], params["F_pad"]

    X_p = jnp.pad(X.astype(jnp.float32), ((0, N_pad - N), (0, K_pad - in_dim)))

    cparams = pltpu.CompilerParams(
        dimension_semantics=("parallel",),            # 2 TensorCores on v7x
        vmem_limit_bytes=_VMEM_LIMIT_BYTES,
    )

    # ---- pass (a): T = d * (X @ W), row-tiled over nodes ----
    tm_a = _pick_row_tile(N_pad, K_pad * 4)           # X rows streamed in f32
    t = pl.pallas_call(
        gcn_xw_kernel,
        out_shape=jax.ShapeDtypeStruct((N_pad, F_pad), jnp.float32),
        grid=(N_pad // tm_a,),
        in_specs=[
            pl.BlockSpec((tm_a, 1), lambda i: (i, 0)),        # d rows
            pl.BlockSpec((tm_a, K_pad), lambda i: (i, 0)),    # X rows
            pl.BlockSpec((K_pad, F_pad), lambda i: (0, 0)),   # W (resident)
        ],
        out_specs=pl.BlockSpec((tm_a, F_pad), lambda i: (i, 0)),
        compiler_params=cparams,
    )(params["d"], X_p, params["W"])

    # ---- pass (b): H = relu(d * (A @ T + T)), row-tiled over A's rows ----
    tm_b = _pick_row_tile(N_pad, N_pad * 2)           # A rows streamed in bf16
    out_padded = pl.pallas_call(
        functools.partial(gcn_agg_kernel, tm_b),
        out_shape=jax.ShapeDtypeStruct((N_pad, F_pad), jnp.float32),
        grid=(N_pad // tm_b,),
        in_specs=[
            pl.BlockSpec((tm_b, 1), lambda i: (i, 0)),        # d rows
            pl.BlockSpec((tm_b, N_pad), lambda i: (i, 0)),    # A rows (bf16)
            pl.BlockSpec((N_pad, F_pad), lambda i: (0, 0)),   # T (resident)
        ],
        out_specs=pl.BlockSpec((tm_b, F_pad), lambda i: (i, 0)),
        compiler_params=cparams,
    )(params["d"], params["A"], t)

    return out_padded[:N, :out_dim]


def gcn_layer_forward(A, W, X):
    """One-shot convenience wrapper: prepare (as in __init__) + forward."""
    return gcn_forward(gcn_prepare(A, W), X)


def gcn_layer_reference(A, W, X):
    """Pure-JAX reference mirroring the PyTorch forward exactly."""
    N = A.shape[0]
    A = A.astype(jnp.float32)
    A_hat = A + jnp.eye(N, dtype=jnp.float32)
    deg = jnp.sum(A, axis=1)
    D_neg_sqrt = jnp.diag(jnp.power(deg, -0.5)).astype(jnp.float32)
    support_1 = D_neg_sqrt @ (A_hat @ D_neg_sqrt)
    support_2 = support_1 @ (X.astype(jnp.float32) @ W.astype(jnp.float32))
    return jnp.maximum(support_2, 0.0)


if __name__ == "__main__":
    input_dim = 32   # number of nodes == feature dim (A is input_dim x input_dim)
    output_dim = 16

    key = jax.random.PRNGKey(0)
    k_a, k_w, k_x = jax.random.split(key, 3)

    # Deterministic adjacency: symmetric 0/1 matrix with self-loops so every
    # node has degree >= 1 (avoids 0^-0.5 = inf in D^-1/2).
    a_raw = (jax.random.uniform(k_a, (input_dim, input_dim)) > 0.5).astype(jnp.float32)
    A = jnp.clip(a_raw + a_raw.T, 0.0, 1.0)
    A = A.at[jnp.arange(input_dim), jnp.arange(input_dim)].set(1.0)

    # W ~ torch.rand(input_dim, output_dim) -> uniform [0, 1)
    W = jax.random.uniform(k_w, (input_dim, output_dim), dtype=jnp.float32)

    # Node features X: (N, input_dim)
    X = jax.random.normal(k_x, (input_dim, input_dim), dtype=jnp.float32)

    H = gcn_layer_forward(A, W, X)
    H = jax.block_until_ready(H)

    H_ref = gcn_layer_reference(A, W, X)
    assert H.shape == (input_dim, output_dim)
    assert jnp.allclose(H, H_ref, atol=1e-4, rtol=1e-4)

    print("KERNEL_OK")
</pallas_src>

<mosaic_0001>
module attributes {stable_mosaic.version = 11 : i64} {
  func.func @gcn_xw_kernel(%arg0: i32, %arg1: memref<128x1xf32, #tpu.memory_space<vmem>>, %arg2: memref<128x128xf32, #tpu.memory_space<vmem>>, %arg3: memref<128x128xf32, #tpu.memory_space<vmem>>, %arg4: memref<128x128xf32, #tpu.memory_space<vmem>>) attributes {dimension_semantics = [#tpu.dimension_semantics<parallel>], iteration_bounds = array<i64: 1>, scalar_prefetch = 0 : i64, scratch_operands = 0 : i64, tpu.core_type = #tpu.core_type<tc>, window_params = [{transform_indices = @transform_0, window_bounds = array<i64: 128, 1>}, {transform_indices = @transform_1, window_bounds = array<i64: 128, 128>}, {pipeline_mode = #tpu.pipeline_mode<synchronous>, transform_indices = @transform_2, window_bounds = array<i64: 128, 128>}, {transform_indices = @transform_3, window_bounds = array<i64: 128, 128>}]} {
    %c0 = arith.constant 0 : index
    %c0_0 = arith.constant 0 : index
    %0 = vector.load %arg2[%c0, %c0_0] : memref<128x128xf32, #tpu.memory_space<vmem>>, vector<128x128xf32>
    %c0_1 = arith.constant 0 : index
    %c0_2 = arith.constant 0 : index
    %1 = vector.load %arg3[%c0_1, %c0_2] : memref<128x128xf32, #tpu.memory_space<vmem>>, vector<128x128xf32>
    %cst = arith.constant dense<0.000000e+00> : vector<128x128xf32>
    %2 = tpu.matmul %0, %1, %cst {dimension_numbers = #tpu.dot_dimension_numbers<[1], [0], [0], [1], [0, 0, 1, 1], [], []>} : vector<128x128xf32>, vector<128x128xf32>, vector<128x128xf32> -> vector<128x128xf32>
    %c0_3 = arith.constant 0 : index
    %c0_4 = arith.constant 0 : index
    %3 = vector.load %arg1[%c0_3, %c0_4] : memref<128x1xf32, #tpu.memory_space<vmem>>, vector<128x1xf32>
    %4 = vector.broadcast %3 : vector<128x1xf32> to vector<128x128xf32>
    %5 = arith.mulf %4, %2 : vector<128x128xf32>
    %c0_5 = arith.constant 0 : index
    %c0_6 = arith.constant 0 : index
    %6 = vector.load %arg4[%c0_5, %c0_6] : memref<128x128xf32, #tpu.memory_space<vmem>>, vector<128x128xf32>
    tpu.vector_store %arg4[%c0_5, %c0_6], %5 {strides = array<i32>} : memref<128x128xf32, #tpu.memory_space<vmem>>, vector<128x128xf32>,
    return
  }
  func.func @transform_0(%arg0: i32) -> (i32, i32) {
    %c0_i32 = arith.constant 0 : i32
    %c0_i32_0 = arith.constant 0 : i32
    return %arg0, %c0_i32 : i32, i32
  }
  func.func @transform_1(%arg0: i32) -> (i32, i32) {
    %c0_i32 = arith.constant 0 : i32
    %c0_i32_0 = arith.constant 0 : i32
    return %arg0, %c0_i32 : i32, i32
  }
  func.func @transform_2(%arg0: i32) -> (i32, i32) {
    %c0_i32 = arith.constant 0 : i32
    %c0_i32_0 = arith.constant 0 : i32
    %c0_i32_1 = arith.constant 0 : i32
    return %c0_i32, %c0_i32_0 : i32, i32
  }
  func.func @transform_3(%arg0: i32) -> (i32, i32) {
    %c0_i32 = arith.constant 0 : i32
    %c0_i32_0 = arith.constant 0 : i32
    return %arg0, %c0_i32 : i32, i32
  }
}

</mosaic_0001>

<llo_original>
// kernel: tpu_custom_call.1
$region0: #{tpu_custom_call.1}
  #allocation0 [shape = 'u32[]', space=smem, size = 0x4, offset = 0x4, fixed_abs, tag = 'smem constant byte address 0x4 - core index']
  #allocation1 [shape = 'u32[144,128]{1,0:T(1,128)}', space=vmem, size = 0x12000, scoped, tag = 'internal scratch']
  %s0 = inlined_call_operand.vmem [shape: f32[128,1], index: 0, kind: input, shape index: {}]
  %s1 = inlined_call_operand.vmem [shape: f32[128,128], index: 1, kind: input, shape index: {}]
  %s2 = inlined_call_operand.hbm [shape: f32[128,128], index: 2, kind: input, shape index: {}]
  %s3 = inlined_call_operand.hbm [shape: f32[128,128], index: 3, kind: output, shape index: {}]
  %s4 = sld [smem:[#allocation0]]
  $region26: #{tpu_custom_call.1} parent=0
    _
  %s6 = ssub.s32 1, %s4
  %s7 = scalar_select 0, %s6, %s4
  $region1: #{tpu_custom_call.1} parent=0
    #allocation2 [shape = 'u8[65536]{0}', space=vmem, size = 0x10000, scoped, tag = 'input window, operand 2, single buffered']
    #allocation3 [shape = 's32[1]{0}', space=sflag, size = 0x4, scoped, tag = 'scoped memory for tpu_custom_call.1']
    #allocation4 [shape = 's32[1]{0}', space=sflag, size = 0x4, scoped, tag = 'scoped memory for tpu_custom_call.1']
    #allocation5 [shape = 'u8[65536]{0}', space=vmem, size = 0x10000, scoped, tag = 'output window, operand 0, single buffered']
    %8 = vsyncpa [#allocation3], 0
    %9 = vsyncpa [#allocation4], 0
    // Predicated region
    $region2: #{tpu_custom_call.1} parent=1 // pred_check
      _
    $region3: #{tpu_custom_call.1} parent=1 // pred_check_branch
      %11 = sbr.rel (0) target = $region5
    $region4: #{tpu_custom_call.1} parent=1 // pred_region
      _
    $region5: #{tpu_custom_call.1} parent=1 // pred_fallthru
      _
    // Predicated region
    $region6: #{tpu_custom_call.1} parent=1 // pred_check
      _
    $region7: #{tpu_custom_call.1} parent=1 // pred_check_branch
      %13 = sbr.rel (0) target = $region9
    $region8: #{tpu_custom_call.1} parent=1 // pred_region
      _
    $region9: #{tpu_custom_call.1} parent=1 // pred_fallthru
      _
    // Predicated region
    $region10: #{tpu_custom_call.1} parent=1 // pred_check
      _
    $region11: #{tpu_custom_call.1} parent=1 // pred_check_branch
      %15 = sbr.rel (0) target = $region13
    $region12: #{tpu_custom_call.1} parent=1 // pred_region
      %s17 = ssub.s32 2048, 2048
      %18 = vsyncadd [#allocation3], %s17
      %s19 = sshll.u32 [#allocation2], 4
      %s20 = int_to_ptr.vmem [resolvable:$true] %s19
      %25 = dma.hbm_to_vmem [thread:$0]  %s2, 2048, %s20, [#allocation3], 128, 128, 8
    $region13: #{tpu_custom_call.1} parent=1 // pred_fallthru
      _
    // Predicated region
    $region14: #{tpu_custom_call.1} parent=1 // pred_check
      _
    $region15: #{tpu_custom_call.1} parent=1 // pred_check_branch
      %27 = sbr.rel (0) target = $region17
    $region16: #{tpu_custom_call.1} parent=1 // pred_region
      %28 = dma.done [#allocation3], 2048
    $region17: #{tpu_custom_call.1} parent=1 // pred_fallthru
      _
    %v29 = vld [vmem:[%s1] sm:$0xff]
    %v30 = vld [vmem:[%s1 + $0x8] sm:$0xff]
    %v31 = vld [vmem:[%s1 + $0x10] sm:$0xff]
    %v32 = vld [vmem:[%s1 + $0x18] sm:$0xff]
    %v33 = vld [vmem:[%s1 + $0x20] sm:$0xff]
    %v34 = vld [vmem:[%s1 + $0x28] sm:$0xff]
    %v35 = vld [vmem:[%s1 + $0x30] sm:$0xff]
    %v36 = vld [vmem:[%s1 + $0x38] sm:$0xff]
    %v37 = vld [vmem:[%s1 + $0x40] sm:$0xff]
    %v38 = vld [vmem:[%s1 + $0x48] sm:$0xff]
    %v39 = vld [vmem:[%s1 + $0x50] sm:$0xff]
    %v40 = vld [vmem:[%s1 + $0x58] sm:$0xff]
    %v41 = vld [vmem:[%s1 + $0x60] sm:$0xff]
    %v42 = vld [vmem:[%s1 + $0x68] sm:$0xff]
    %v43 = vld [vmem:[%s1 + $0x70] sm:$0xff]
    %v44 = vld [vmem:[%s1 + $0x78] sm:$0xff]
    %v45 = vld [vmem:[#allocation2] sm:$0xff]
    %v46 = vld [vmem:[#allocation2 + $0x8] sm:$0xff]
    %v47 = vld [vmem:[#allocation2 + $0x10] sm:$0xff]
    %v48 = vld [vmem:[#allocation2 + $0x18] sm:$0xff]
    %v49 = vld [vmem:[#allocation2 + $0x20] sm:$0xff]
    %v50 = vld [vmem:[#allocation2 + $0x28] sm:$0xff]
    %v51 = vld [vmem:[#allocation2 + $0x30] sm:$0xff]
    %v52 = vld [vmem:[#allocation2 + $0x38] sm:$0xff]
    %v53 = vld [vmem:[#allocation2 + $0x40] sm:$0xff]
    %v54 = vld [vmem:[#allocation2 + $0x48] sm:$0xff]
    %v55 = vld [vmem:[#allocation2 + $0x50] sm:$0xff]
    %v56 = vld [vmem:[#allocation2 + $0x58] sm:$0xff]
    %v57 = vld [vmem:[#allocation2 + $0x60] sm:$0xff]
    %v58 = vld [vmem:[#allocation2 + $0x68] sm:$0xff]
    %v59 = vld [vmem:[#allocation2 + $0x70] sm:$0xff]
    %v60 = vld [vmem:[#allocation2 + $0x78] sm:$0xff]
    %61 = vmatprep.subr.mxu0 0.0
    %62 = vmatpush1.msra.mxu0 %v45
    %63 = vmatprep.subr.mxu0 0.0
    %64 = vmatpush1.msra.mxu0 %v46
    %65 = vmatprep.subr.mxu0 0.0
    %66 = vmatpush1.msra.mxu0 %v47
    %67 = vmatprep.subr.mxu0 0.0
    %68 = vmatpush1.msra.mxu0 %v48
    %69 = vmatprep.subr.mxu0 0.0
    %70 = vmatpush1.msra.mxu0 %v49
    %71 = vmatprep.subr.mxu0 0.0
    %72 = vmatpush1.msra.mxu0 %v50
    %73 = vmatprep.subr.mxu0 0.0
    %74 = vmatpush1.msra.mxu0 %v51
    %75 = vmatprep.subr.mxu0 0.0
    %76 = vmatpush1.msra.mxu0 %v52
    %77 = vmatprep.subr.mxu0 0.0
    %78 = vmatpush1.msra.mxu0 %v53
    %79 = vmatprep.subr.mxu0 0.0
    %80 = vmatpush1.msra.mxu0 %v54
    %81 = vmatprep.subr.mxu0 0.0
    %82 = vmatpush1.msra.mxu0 %v55
    %83 = vmatprep.subr.mxu0 0.0
    %84 = vmatpush1.msra.mxu0 %v56
    %85 = vmatprep.subr.mxu0 0.0
    %86 = vmatpush1.msra.mxu0 %v57
    %87 = vmatprep.subr.mxu0 0.0
    %88 = vmatpush1.msra.mxu0 %v58
    %89 = vmatprep.subr.mxu0 0.0
    %90 = vmatpush1.msra.mxu0 %v59
    %91 = vmatprep.subr.mxu0 0.0
    %92 = vmatpush1.msra.mxu0 %v60
    %93 = vmatprep.subr.mxu0 0.0
    %94 = vmatpush1.msra.mxu0 0.0
    %95 = vmatprep.subr.mxu0 0.0
    %96 = vmatpush1.msra.mxu0 0.0
    %97 = vmatprep.subr.mxu0 0.0
    %98 = vmatpush1.msra.mxu0 0.0
    %99 = vmatprep.subr.mxu0 0.0
    %100 = vmatpush1.msra.mxu0 0.0
    %101 = vmatprep.subr.mxu0 0.0
    %102 = vmatpush1.msra.mxu0 0.0
    %103 = vmatprep.subr.mxu0 0.0
    %104 = vmatpush1.msra.mxu0 0.0
    %105 = vmatprep.subr.mxu0 0.0
    %106 = vmatpush1.msra.mxu0 0.0
    %107 = vmatprep.subr.mxu0 0.0
    %108 = vmatpush1.msra.mxu0 0.0
    %109 = vmatprep.subr.mxu0 0.0
    %110 = vmatpush1.msra.mxu0 0.0
    %111 = vmatprep.subr.mxu0 0.0
    %112 = vmatpush1.msra.mxu0 0.0
    %113 = vmatprep.subr.mxu0 0.0
    %114 = vmatpush1.msra.mxu0 0.0
    %115 = vmatprep.subr.mxu0 0.0
    %116 = vmatpush1.msra.mxu0 0.0
    %117 = vmatprep.subr.mxu0 0.0
    %118 = vmatpush1.msra.mxu0 0.0
    %119 = vmatprep.subr.mxu0 0.0
    %120 = vmatpush1.msra.mxu0 0.0
    %121 = vmatprep.subr.mxu0 0.0
    %122 = vmatpush1.msra.mxu0 0.0
    %123 = vmatprep.subr.mxu0 0.0
    %124 = vmatpush1.msra.mxu0 0.0
    %125 = vmatprep.mubr.f32.mxu0 0.0
    %126 = vmatmul.mubr.f32.gmra.mrb[0].mxu0 %v29
    %v127 = vpop.f32.mrb[0].mxu0
    %v128 = vadd.f32 0.0, %v127
    %v129 = vpop.f32.mrb[0].mxu0
    %130 = vmatprep.mubr.f32.mxu0 0.0
    %131 = vmatmul.mubr.f32.gmra.mrb[0].mxu0 %v30
    %v132 = vpop.f32.mrb[0].mxu0
    %v133 = vadd.f32 0.0, %v132
    %v134 = vpop.f32.mrb[0].mxu0
    %135 = vmatprep.mubr.f32.mxu0 0.0
    %136 = vmatmul.mubr.f32.gmra.mrb[0].mxu0 %v31
    %v137 = vpop.f32.mrb[0].mxu0
    %v138 = vadd.f32 0.0, %v137
    %v139 = vpop.f32.mrb[0].mxu0
    %140 = vmatprep.mubr.f32.mxu0 0.0
    %141 = vmatmul.mubr.f32.gmra.mrb[0].mxu0 %v32
    %v142 = vpop.f32.mrb[0].mxu0
    %v143 = vadd.f32 0.0, %v142
    %v144 = vpop.f32.mrb[0].mxu0
    %145 = vmatprep.mubr.f32.mxu0 0.0
    %146 = vmatmul.mubr.f32.gmra.mrb[0].mxu0 %v33
    %v147 = vpop.f32.mrb[0].mxu0
    %v148 = vadd.f32 0.0, %v147
    %v149 = vpop.f32.mrb[0].mxu0
    %150 = vmatprep.mubr.f32.mxu0 0.0
    %151 = vmatmul.mubr.f32.gmra.mrb[0].mxu0 %v34
    %v152 = vpop.f32.mrb[0].mxu0
    %v153 = vadd.f32 0.0, %v152
    %v154 = vpop.f32.mrb[0].mxu0
    %155 = vmatprep.mubr.f32.mxu0 0.0
    %156 = vmatmul.mubr.f32.gmra.mrb[0].mxu0 %v35
    %v157 = vpop.f32.mrb[0].mxu0
    %v158 = vadd.f32 0.0, %v157
    %v159 = vpop.f32.mrb[0].mxu0
    %160 = vmatprep.mubr.f32.mxu0 0.0
    %161 = vmatmul.mubr.f32.gmra.mrb[0].mxu0 %v36
    %v162 = vpop.f32.mrb[0].mxu0
    %v163 = vadd.f32 0.0, %v162
    %v164 = vpop.f32.mrb[0].mxu0
    %165 = vmatprep.mubr.f32.mxu0 0.0
    %166 = vmatmul.mubr.f32.gmra.mrb[0].mxu0 %v37
    %v167 = vpop.f32.mrb[0].mxu0
    %v168 = vadd.f32 0.0, %v167
    %v169 = vpop.f32.mrb[0].mxu0
    %170 = vmatprep.mubr.f32.mxu0 0.0
    %171 = vmatmul.mubr.f32.gmra.mrb[0].mxu0 %v38
    %v172 = vpop.f32.mrb[0].mxu0
    %v173 = vadd.f32 0.0, %v172
    %v174 = vpop.f32.mrb[0].mxu0
    %175 = vmatprep.mubr.f32.mxu0 0.0
    %176 = vmatmul.mubr.f32.gmra.mrb[0].mxu0 %v39
    %v177 = vpop.f32.mrb[0].mxu0
    %v178 = vadd.f32 0.0, %v177
    %v179 = vpop.f32.mrb[0].mxu0
    %180 = vmatprep.mubr.f32.mxu0 0.0
    %181 = vmatmul.mubr.f32.gmra.mrb[0].mxu0 %v40
    %v182 = vpop.f32.mrb[0].mxu0
    %v183 = vadd.f32 0.0, %v182
    %v184 = vpop.f32.mrb[0].mxu0
    %185 = vmatprep.mubr.f32.mxu0 0.0
    %186 = vmatmul.mubr.f32.gmra.mrb[0].mxu0 %v41
    %v187 = vpop.f32.mrb[0].mxu0
    %v188 = vadd.f32 0.0, %v187
    %v189 = vpop.f32.mrb[0].mxu0
    %190 = vmatprep.mubr.f32.mxu0 0.0
    %191 = vmatmul.mubr.f32.gmra.mrb[0].mxu0 %v42
    %v192 = vpop.f32.mrb[0].mxu0
    %v193 = vadd.f32 0.0, %v192
    %v194 = vpop.f32.mrb[0].mxu0
    %195 = vmatprep.mubr.f32.mxu0 0.0
    %196 = vmatmul.mubr.f32.gmra.mrb[0].mxu0 %v43
    %v197 = vpop.f32.mrb[0].mxu0
    %v198 = vadd.f32 0.0, %v197
    %v199 = vpop.f32.mrb[0].mxu0
    %200 = vmatprep.mubr.f32.mxu0 0.0
    %201 = vmatmul.mubr.f32.gmra.mrb[0].mxu0 %v44
    %v202 = vpop.f32.mrb[0].mxu0
    %v203 = vadd.f32 0.0, %v202
    %v204 = vpop.f32.mrb[0].mxu0
    %205 = vdwg.mxu0
    %v206 = vld [vmem:[%s0] sm:$0xff]
    %v207 = vld [vmem:[%s0 + $0x8] sm:$0xff]
    %v208 = vld [vmem:[%s0 + $0x10] sm:$0xff]
    %v209 = vld [vmem:[%s0 + $0x18] sm:$0xff]
    %v210 = vld [vmem:[%s0 + $0x20] sm:$0xff]
    %v211 = vld [vmem:[%s0 + $0x28] sm:$0xff]
    %v212 = vld [vmem:[%s0 + $0x30] sm:$0xff]
    %v213 = vld [vmem:[%s0 + $0x38] sm:$0xff]
    %v214 = vld [vmem:[%s0 + $0x40] sm:$0xff]
    %v215 = vld [vmem:[%s0 + $0x48] sm:$0xff]
    %v216 = vld [vmem:[%s0 + $0x50] sm:$0xff]
    %v217 = vld [vmem:[%s0 + $0x58] sm:$0xff]
    %v218 = vld [vmem:[%s0 + $0x60] sm:$0xff]
    %v219 = vld [vmem:[%s0 + $0x68] sm:$0xff]
    %v220 = vld [vmem:[%s0 + $0x70] sm:$0xff]
    %v221 = vld [vmem:[%s0 + $0x78] sm:$0xff]
    %223 = vset.pattern.permute.xlu0 0
    %224 = vperm.xlu0 %223, %v206
    %v225 = vpop.permute.xlu0 %224
    %228 = vset.pattern.permute.xlu0 0
    %229 = vperm.xlu0 %228, %v207
    %v230 = vpop.permute.xlu0 %229
    %233 = vset.pattern.permute.xlu0 0
    %234 = vperm.xlu0 %233, %v208
    %v235 = vpop.permute.xlu0 %234
    %238 = vset.pattern.permute.xlu0 0
    %239 = vperm.xlu0 %238, %v209
    %v240 = vpop.permute.xlu0 %239
    %243 = vset.pattern.permute.xlu0 0
    %244 = vperm.xlu0 %243, %v210
    %v245 = vpop.permute.xlu0 %244
    %248 = vset.pattern.permute.xlu0 0
    %249 = vperm.xlu0 %248, %v211
    %v250 = vpop.permute.xlu0 %249
    %253 = vset.pattern.permute.xlu0 0
    %254 = vperm.xlu0 %253, %v212
    %v255 = vpop.permute.xlu0 %254
    %258 = vset.pattern.permute.xlu0 0
    %259 = vperm.xlu0 %258, %v213
    %v260 = vpop.permute.xlu0 %259
    %263 = vset.pattern.permute.xlu0 0
    %264 = vperm.xlu0 %263, %v214
    %v265 = vpop.permute.xlu0 %264
    %268 = vset.pattern.permute.xlu0 0
    %269 = vperm.xlu0 %268, %v215
    %v270 = vpop.permute.xlu0 %269
    %273 = vset.pattern.permute.xlu0 0
    %274 = vperm.xlu0 %273, %v216
    %v275 = vpop.permute.xlu0 %274
    %278 = vset.pattern.permute.xlu0 0
    %279 = vperm.xlu0 %278, %v217
    %v280 = vpop.permute.xlu0 %279
    %283 = vset.pattern.permute.xlu0 0
    %284 = vperm.xlu0 %283, %v218
    %v285 = vpop.permute.xlu0 %284
    %288 = vset.pattern.permute.xlu0 0
    %289 = vperm.xlu0 %288, %v219
    %v290 = vpop.permute.xlu0 %289
    %293 = vset.pattern.permute.xlu0 0
    %294 = vperm.xlu0 %293, %v220
    %v295 = vpop.permute.xlu0 %294
    %298 = vset.pattern.permute.xlu0 0
    %299 = vperm.xlu0 %298, %v221
    %v300 = vpop.permute.xlu0 %299
    %v302 = vmul.f32 %v225, %v128
    %v303 = vmul.f32 %v230, %v133
    %v304 = vmul.f32 %v235, %v138
    %v305 = vmul.f32 %v240, %v143
    %v306 = vmul.f32 %v245, %v148
    %v307 = vmul.f32 %v250, %v153
    %v308 = vmul.f32 %v255, %v158
    %v309 = vmul.f32 %v260, %v163
    %v310 = vmul.f32 %v265, %v168
    %v311 = vmul.f32 %v270, %v173
    %v312 = vmul.f32 %v275, %v178
    %v313 = vmul.f32 %v280, %v183
    %v314 = vmul.f32 %v285, %v188
    %v315 = vmul.f32 %v290, %v193
    %v316 = vmul.f32 %v295, %v198
    %v317 = vmul.f32 %v300, %v203
    %318 = vst [vmem:[#allocation5] sm:$0xff] %v302
    %319 = vst [vmem:[#allocation5 + $0x8] sm:$0xff] %v303
    %320 = vst [vmem:[#allocation5 + $0x10] sm:$0xff] %v304
    %321 = vst [vmem:[#allocation5 + $0x18] sm:$0xff] %v305
    %322 = vst [vmem:[#allocation5 + $0x20] sm:$0xff] %v306
    %323 = vst [vmem:[#allocation5 + $0x28] sm:$0xff] %v307
    %324 = vst [vmem:[#allocation5 + $0x30] sm:$0xff] %v308
    %325 = vst [vmem:[#allocation5 + $0x38] sm:$0xff] %v309
    %326 = vst [vmem:[#allocation5 + $0x40] sm:$0xff] %v310
    %327 = vst [vmem:[#allocation5 + $0x48] sm:$0xff] %v311
    %328 = vst [vmem:[#allocation5 + $0x50] sm:$0xff] %v312
    %329 = vst [vmem:[#allocation5 + $0x58] sm:$0xff] %v313
    %330 = vst [vmem:[#allocation5 + $0x60] sm:$0xff] %v314
    %331 = vst [vmem:[#allocation5 + $0x68] sm:$0xff] %v315
    %332 = vst [vmem:[#allocation5 + $0x70] sm:$0xff] %v316
    %333 = vst [vmem:[#allocation5 + $0x78] sm:$0xff] %v317
    // Predicated region
    $region18: #{tpu_custom_call.1} parent=1 // pred_check
      _
    $region19: #{tpu_custom_call.1} parent=1 // pred_check_branch
      %335 = sbr.rel (0) target = $region21
    $region20: #{tpu_custom_call.1} parent=1 // pred_region
      %s337 = ssub.s32 2048, 2048
      %338 = vsyncadd [#allocation4], %s337
      %s339 = sshll.u32 [#allocation5], 4
      %s340 = int_to_ptr.vmem [resolvable:$true] %s339
      %345 = dma.vmem_to_hbm [thread:$0]  %s340, 2048, %s3, [#allocation4], 128, 128, 8
    $region21: #{tpu_custom_call.1} parent=1 // pred_fallthru
      _
    // Predicated region
    $region22: #{tpu_custom_call.1} parent=1 // pred_check
      _
    $region23: #{tpu_custom_call.1} parent=1 // pred_check_branch
      %347 = sbr.rel (0) target = $region25
    $region24: #{tpu_custom_call.1} parent=1 // pred_region
      %348 = dma.done [#allocation4], 2048
    $region25: #{tpu_custom_call.1} parent=1 // pred_fallthru
      _
    %349 = vsyncpa [#allocation3], 1
    %350 = vsyncpa [#allocation4], 1

</llo_original>
